<compile_context>
chip_gen: v6e
topology: v6e:2x2x1
jax: 0.10.0
libtpu: 0.0.40
codegen_flags: <defaults>
</compile_context>

<pallas_src>
import functools

import jax
import jax.numpy as jnp
from jax.experimental import pallas as pl
from jax.experimental.pallas import tpu as pltpu


def _evonorm_act_kernel(x_ref, v_ref, w_ref, b_ref, o_ref, *, eps):
    # x block: (Bt, G, L) with L = Cg*H*W; param blocks: (G, L).
    x = x_ref[...].astype(jnp.float32)            # (Bt, G, L)
    v = v_ref[...].astype(jnp.float32)            # (G, L)
    w = w_ref[...].astype(jnp.float32)            # (G, L)
    b = b_ref[...].astype(jnp.float32)            # (G, L)

    # n = x * sigmoid(x * v)
    n = x * jax.nn.sigmoid(x * v)

    # Per-(batch, group) variance over all Cg*H*W elements (unbiased=False),
    # two-pass form for numerical safety.
    mean = jnp.mean(x, axis=-1, keepdims=True)                        # (Bt, G, 1)
    var = jnp.mean(jnp.square(x - mean), axis=-1, keepdims=True)      # (Bt, G, 1)
    inv_std = jax.lax.rsqrt(var + eps)                                # (Bt, G, 1)

    # Reassociated affine: scale = w * inv_std, then one multiply + add.
    o_ref[...] = (n * (w * inv_std) + b).astype(o_ref.dtype)


def _choose_batch_tile(B, G, L, x_itemsize, p_itemsize,
                       budget_bytes=20 * 1024 * 1024):
    """Largest divisor of B whose double-buffered block fits the VMEM budget,
    while keeping >= 2 grid steps when B >= 2 (v7x has 2 TensorCores)."""
    per_batch = G * L * x_itemsize
    param_bytes = 3 * G * L * p_itemsize * 2       # conservative: 2x buffered
    best = 1
    for bt in range(1, B + 1):
        if B % bt:
            continue
        # in + out, double-buffered, plus f32 temporaries headroom.
        need = 4 * bt * per_batch + 2 * bt * G * L * 4 + param_bytes
        if need <= budget_bytes:
            best = bt
    if B >= 2 and B // best < 2:
        for bt in range(best, 0, -1):
            if B % bt == 0 and B // bt >= 2:
                best = bt
                break
    return best


def evonorm_sample2d(x, weight, bias, v=None, *, groups=8, eps=1e-5,
                     apply_act=True, vmem_budget_bytes=20 * 1024 * 1024):
    """EvoNormSample2d forward.  x: (B, C, H, W) NCHW; params: (1, C, 1, 1)."""
    assert x.ndim == 4, "expected 4D input"
    B, C, H, W = x.shape
    assert C % groups == 0

    if not apply_act:
        # Pure per-channel affine: no reduction, trivially memory-bound; XLA
        # fuses x * w + b optimally, so Pallas adds only overhead here.
        return x * weight + bias

    assert v is not None
    G = groups
    Cg = C // G
    HW = H * W
    L = Cg * HW

    # Grouped, lane-flattened layout: (B, G, Cg*HW).
    xr = x.reshape(B, G, L)

    # Pre-broadcast per-channel params to the same (G, L) layout once; they
    # are fetched into VMEM a single time (grid-invariant index_map).
    def _bcast(p):
        return jnp.broadcast_to(p.reshape(G, Cg, 1), (G, Cg, HW)).reshape(G, L)

    vr = _bcast(v)
    wr = _bcast(weight)
    br = _bcast(bias)

    bt = _choose_batch_tile(B, G, L, jnp.dtype(x.dtype).itemsize,
                            jnp.dtype(vr.dtype).itemsize, vmem_budget_bytes)
    grid = (B // bt,)

    x_spec = pl.BlockSpec((bt, G, L), lambda i: (i, 0, 0))
    p_spec = pl.BlockSpec((G, L), lambda i: (0, 0))   # resident across grid

    out = pl.pallas_call(
        functools.partial(_evonorm_act_kernel, eps=eps),
        out_shape=jax.ShapeDtypeStruct((B, G, L), x.dtype),
        grid=grid,
        in_specs=[x_spec, p_spec, p_spec, p_spec],
        out_specs=x_spec,
        compiler_params=pltpu.CompilerParams(
            dimension_semantics=("parallel",)),
    )(xr, vr, wr, br)

    return out.reshape(B, C, H, W)


def _reference(x, weight, bias, v, groups, eps, apply_act):
    """Pure-JAX reference matching the PyTorch forward."""
    B, C, H, W = x.shape
    out = x
    if apply_act:
        n = x * jax.nn.sigmoid(x * v)
        xg = x.reshape(B, groups, -1)
        var = jnp.var(xg, axis=-1, keepdims=True)  # unbiased=False
        out = n.reshape(B, groups, -1) / jnp.sqrt(var + eps)
        out = out.reshape(B, C, H, W)
    return out * weight + bias


if __name__ == "__main__":
    B, C, H, W = 2, 16, 16, 16
    groups = 8
    eps = 1e-5

    key = jax.random.PRNGKey(0)
    x = jax.random.normal(key, (B, C, H, W), dtype=jnp.float32)

    # Deterministic parameter init matching reset_parameters():
    # weight = ones, bias = zeros, v = ones.
    param_shape = (1, C, 1, 1)
    weight = jnp.ones(param_shape, jnp.float32)
    bias = jnp.zeros(param_shape, jnp.float32)
    v = jnp.ones(param_shape, jnp.float32)

    out = evonorm_sample2d(x, weight, bias, v, groups=groups, eps=eps,
                           apply_act=True)
    out = jax.block_until_ready(out)

    ref = _reference(x, weight, bias, v, groups, eps, True)
    assert out.shape == (B, C, H, W)
    assert jnp.allclose(out, ref, atol=1e-5, rtol=1e-5)

    # apply_act=False path (pure affine, handled by XLA per perf review).
    out_na = evonorm_sample2d(x, weight, bias, None, groups=groups, eps=eps,
                              apply_act=False)
    out_na = jax.block_until_ready(out_na)
    ref_na = _reference(x, weight, bias, None, groups, eps, False)
    assert jnp.allclose(out_na, ref_na, atol=1e-5, rtol=1e-5)

    print("KERNEL_OK")
</pallas_src>

<mosaic_0001>
module attributes {stable_mosaic.version = 11 : i64} {
  func.func @_evonorm_act_kernel(%arg0: i32, %arg1: memref<1x8x512xf32, #tpu.memory_space<vmem>>, %arg2: memref<8x512xf32, #tpu.memory_space<vmem>>, %arg3: memref<8x512xf32, #tpu.memory_space<vmem>>, %arg4: memref<8x512xf32, #tpu.memory_space<vmem>>, %arg5: memref<1x8x512xf32, #tpu.memory_space<vmem>>) attributes {dimension_semantics = [#tpu.dimension_semantics<parallel>], iteration_bounds = array<i64: 2>, scalar_prefetch = 0 : i64, scratch_operands = 0 : i64, tpu.core_type = #tpu.core_type<tc>, window_params = [{transform_indices = @transform_0, window_bounds = array<i64: 1, 8, 512>}, {pipeline_mode = #tpu.pipeline_mode<synchronous>, transform_indices = @transform_1, window_bounds = array<i64: 8, 512>}, {pipeline_mode = #tpu.pipeline_mode<synchronous>, transform_indices = @transform_2, window_bounds = array<i64: 8, 512>}, {pipeline_mode = #tpu.pipeline_mode<synchronous>, transform_indices = @transform_3, window_bounds = array<i64: 8, 512>}, {transform_indices = @transform_4, window_bounds = array<i64: 1, 8, 512>}]} {
    %c0 = arith.constant 0 : index
    %c0_0 = arith.constant 0 : index
    %c0_1 = arith.constant 0 : index
    %0 = vector.load %arg1[%c0, %c0_0, %c0_1] : memref<1x8x512xf32, #tpu.memory_space<vmem>>, vector<1x8x512xf32>
    %c0_2 = arith.constant 0 : index
    %c0_3 = arith.constant 0 : index
    %1 = vector.load %arg2[%c0_2, %c0_3] : memref<8x512xf32, #tpu.memory_space<vmem>>, vector<8x512xf32>
    %c0_4 = arith.constant 0 : index
    %c0_5 = arith.constant 0 : index
    %2 = vector.load %arg3[%c0_4, %c0_5] : memref<8x512xf32, #tpu.memory_space<vmem>>, vector<8x512xf32>
    %c0_6 = arith.constant 0 : index
    %c0_7 = arith.constant 0 : index
    %3 = vector.load %arg4[%c0_6, %c0_7] : memref<8x512xf32, #tpu.memory_space<vmem>>, vector<8x512xf32>
    %4 = vector.shape_cast %1 : vector<8x512xf32> to vector<1x8x512xf32>
    %5 = arith.mulf %0, %4 : vector<1x8x512xf32>
    %6 = arith.negf %5 : vector<1x8x512xf32>
    %7 = math.exp %6 : vector<1x8x512xf32>
    %cst = arith.constant 1.000000e+00 : f32
    %8 = vector.broadcast %cst : f32 to vector<1x8x512xf32>
    %9 = arith.addf %8, %7 : vector<1x8x512xf32>
    %10 = arith.divf %8, %9 : vector<1x8x512xf32>
    %11 = arith.mulf %0, %10 : vector<1x8x512xf32>
    %cst_8 = arith.constant dense<0.000000e+00> : vector<1x8xf32>
    %12 = vector.multi_reduction <add>, %0, %cst_8 [2] : vector<1x8x512xf32> to vector<1x8xf32>
    %13 = vector.shape_cast %12 : vector<1x8xf32> to vector<1x8x1xf32>
    %cst_9 = arith.constant 5.120000e+02 : f32
    %14 = vector.broadcast %cst_9 : f32 to vector<1x8x1xf32>
    %15 = arith.divf %13, %14 : vector<1x8x1xf32>
    %16 = vector.broadcast %15 : vector<1x8x1xf32> to vector<1x8x512xf32>
    %17 = arith.subf %0, %16 : vector<1x8x512xf32>
    %18 = arith.mulf %17, %17 : vector<1x8x512xf32>
    %cst_10 = arith.constant dense<0.000000e+00> : vector<1x8xf32>
    %19 = vector.multi_reduction <add>, %18, %cst_10 [2] : vector<1x8x512xf32> to vector<1x8xf32>
    %20 = vector.shape_cast %19 : vector<1x8xf32> to vector<1x8x1xf32>
    %cst_11 = arith.constant 5.120000e+02 : f32
    %21 = vector.broadcast %cst_11 : f32 to vector<1x8x1xf32>
    %22 = arith.divf %20, %21 : vector<1x8x1xf32>
    %cst_12 = arith.constant 9.99999974E-6 : f32
    %23 = vector.broadcast %cst_12 : f32 to vector<1x8x1xf32>
    %24 = arith.addf %22, %23 : vector<1x8x1xf32>
    %25 = math.rsqrt %24 : vector<1x8x1xf32>
    %26 = vector.shape_cast %2 : vector<8x512xf32> to vector<1x8x512xf32>
    %27 = vector.broadcast %25 : vector<1x8x1xf32> to vector<1x8x512xf32>
    %28 = arith.mulf %26, %27 : vector<1x8x512xf32>
    %29 = arith.mulf %11, %28 : vector<1x8x512xf32>
    %30 = vector.shape_cast %3 : vector<8x512xf32> to vector<1x8x512xf32>
    %31 = arith.addf %29, %30 : vector<1x8x512xf32>
    %c0_13 = arith.constant 0 : index
    %c0_14 = arith.constant 0 : index
    %c0_15 = arith.constant 0 : index
    %32 = vector.load %arg5[%c0_13, %c0_14, %c0_15] : memref<1x8x512xf32, #tpu.memory_space<vmem>>, vector<1x8x512xf32>
    tpu.vector_store %arg5[%c0_13, %c0_14, %c0_15], %31 {strides = array<i32>} : memref<1x8x512xf32, #tpu.memory_space<vmem>>, vector<1x8x512xf32>,
    return
  }
  func.func @transform_0(%arg0: i32) -> (i32, i32, i32) {
    %c0_i32 = arith.constant 0 : i32
    %c0_i32_0 = arith.constant 0 : i32
    %c0_i32_1 = arith.constant 0 : i32
    return %arg0, %c0_i32, %c0_i32_0 : i32, i32, i32
  }
  func.func @transform_1(%arg0: i32) -> (i32, i32) {
    %c0_i32 = arith.constant 0 : i32
    %c0_i32_0 = arith.constant 0 : i32
    %c0_i32_1 = arith.constant 0 : i32
    return %c0_i32, %c0_i32_0 : i32, i32
  }
  func.func @transform_2(%arg0: i32) -> (i32, i32) {
    %c0_i32 = arith.constant 0 : i32
    %c0_i32_0 = arith.constant 0 : i32
    %c0_i32_1 = arith.constant 0 : i32
    return %c0_i32, %c0_i32_0 : i32, i32
  }
  func.func @transform_3(%arg0: i32) -> (i32, i32) {
    %c0_i32 = arith.constant 0 : i32
    %c0_i32_0 = arith.constant 0 : i32
    %c0_i32_1 = arith.constant 0 : i32
    return %c0_i32, %c0_i32_0 : i32, i32
  }
  func.func @transform_4(%arg0: i32) -> (i32, i32, i32) {
    %c0_i32 = arith.constant 0 : i32
    %c0_i32_0 = arith.constant 0 : i32
    %c0_i32_1 = arith.constant 0 : i32
    return %arg0, %c0_i32, %c0_i32_0 : i32, i32, i32
  }
}

</mosaic_0001>

<llo_original>
// kernel: tpu_custom_call.1
$region0: #{tpu_custom_call.1}
  #allocation0 [shape = 'u32[]', space=smem, size = 0x4, offset = 0x4, fixed_abs, tag = 'smem constant byte address 0x4 - core index']
  #allocation1 [shape = 'u32[144,128]{1,0:T(1,128)}', space=vmem, size = 0x12000, scoped, tag = 'internal scratch']
  %s0 = inlined_call_operand.hbm [shape: f32[2,8,512], index: 0, kind: input, shape index: {}]
  %s1 = inlined_call_operand.hbm [shape: f32[8,512], index: 1, kind: input, shape index: {}]
  %s2 = inlined_call_operand.hbm [shape: f32[8,512], index: 2, kind: input, shape index: {}]
  %s3 = inlined_call_operand.hbm [shape: f32[8,512], index: 3, kind: input, shape index: {}]
  %s4 = inlined_call_operand.hbm [shape: f32[2,8,512], index: 4, kind: output, shape index: {}]
  %s5 = sld [smem:[#allocation0]]
  $region65: #{tpu_custom_call.1} parent=0
    _
  %s7 = ssub.s32 1, %s5
  %s8 = scalar_select 0, %s7, %s5
  $region1: #{tpu_custom_call.1} parent=0
    #allocation2 [shape = 'u8[32768]{0}', space=vmem, size = 0x8000, scoped, tag = 'input window, operand 0']
    #allocation3 [shape = 's32[2]{0}', space=sflag, size = 0x8, scoped, tag = 'scoped memory for tpu_custom_call.1']
    #allocation4 [shape = 's32[2]{0}', space=sflag, size = 0x8, scoped, tag = 'scoped memory for tpu_custom_call.1']
    #allocation5 [shape = 'u8[16384]{0}', space=vmem, size = 0x4000, scoped, tag = 'input window, operand 1, single buffered']
    #allocation6 [shape = 's32[1]{0}', space=sflag, size = 0x4, scoped, tag = 'scoped memory for tpu_custom_call.1']
    #allocation7 [shape = 'u8[16384]{0}', space=vmem, size = 0x4000, scoped, tag = 'input window, operand 2, single buffered']
    #allocation8 [shape = 'u8[16384]{0}', space=vmem, size = 0x4000, scoped, tag = 'input window, operand 3, single buffered']
    #allocation9 [shape = 's32[1]{0}', space=sflag, size = 0x4, scoped, tag = 'scoped memory for tpu_custom_call.1']
    #allocation10 [shape = 'u8[32768]{0}', space=vmem, size = 0x8000, scoped, tag = 'output window, operand 0']
    %9 = vsyncpa [#allocation3], 0
    %s10 = scalar_lea.sflag [#allocation3], 1
    %11 = vsyncpa %s10, 0
    %12 = vsyncpa [#allocation6], 0
    %13 = vsyncpa [#allocation9], 0
    %14 = vsyncpa [#allocation4], 0
    %s15 = scalar_lea.sflag [#allocation4], 1
    %16 = vsyncpa %s15, 0
    loop: start=0, step=1, limit=4
    $region2: #{tpu_custom_call.1} parent=1 // loop_pre_header
      _
    $region3: #{tpu_custom_call.1} parent=1 // loop_header
      %s18 = sphi 0, %s22
      %p19 = scmp.ge.s32.totalorder %s18, 4
      %s28 = sphi 0, %s30
      %s31 = sphi 0, %s28
      %s32 = sphi 0, %s31
      %s48 = sphi 0, %s32
      %s52 = sphi 0, %s52
      %s54 = sphi 0, %s52
      %s55 = sphi 0, %s54
      %s69 = sphi 0, %s55
      %s73 = sphi 0, %s73
      %s75 = sphi 0, %s73
      %s76 = sphi 0, %s75
      %s90 = sphi 0, %s76
      %s94 = sphi 0, %s94
      %s96 = sphi 0, %s94
      %s97 = sphi 0, %s96
      %s111 = sphi 0, %s97
      %s117 = sphi 0, %s119
      %s120 = sphi 0, %s117
      %s121 = sphi 0, %s120
      %s137 = sphi 0, %s121
    $region4: #{tpu_custom_call.1} parent=1 // loop_header_branch
      %21 = sbr.rel (%p19) target = $region8
    $region5: #{tpu_custom_call.1} parent=1 // loop_body
      %s23 = ssub.s32 %s18, 1
      %s24 = ssub.s32 %s18, 2
      %s25 = sadd.s32 %s18, 1
      %s26 = ssub.s32 %s18, %s25
      %p27 = scmp.eq.s32.totalorder %s26, 0
      %s29 = sadd.s32 %s28, 1
      %s30 = scalar_select %p27, %s28, %s29
      %p33 = pneg %p27
      %p34 = scmp.eq.s32.totalorder %s18, 1
      %p35 = por %p33, %p34
      %p36 = scmp.ne.s32.totalorder %s28, %s31
      %p37 = scmp.eq.s32.totalorder %s18, 0
      %p38 = por %p36, %p37
      %p39 = scmp.ne.s32.totalorder %s28, %s31
      %p40 = scmp.eq.s32.totalorder %s23, 1
      %p41 = por %p39, %p40
      %p42 = scmp.ne.s32.totalorder %s31, %s32
      %p43 = scmp.eq.s32.totalorder %s23, 0
      %p44 = por %p42, %p43
      %p45 = scmp.ne.s32.totalorder %s31, %s32
      %p46 = scmp.eq.s32.totalorder %s24, 1
      %p47 = por %p45, %p46
      %p49 = scmp.ne.s32.totalorder %s32, %s48
      %p50 = scmp.eq.s32.totalorder %s24, 0
      %p51 = por %p49, %p50
      %s53 = sadd.s32 %s52, 1
      %p56 = scmp.eq.s32.totalorder %s18, 1
      %p57 = scmp.ne.s32.totalorder %s52, %s54
      %p58 = scmp.eq.s32.totalorder %s18, 0
      %p59 = por %p57, %p58
      %p60 = scmp.ne.s32.totalorder %s52, %s54
      %p61 = scmp.eq.s32.totalorder %s23, 1
      %p62 = por %p60, %p61
      %p63 = scmp.ne.s32.totalorder %s54, %s55
      %p64 = scmp.eq.s32.totalorder %s23, 0
      %p65 = por %p63, %p64
      %p66 = scmp.ne.s32.totalorder %s54, %s55
      %p67 = scmp.eq.s32.totalorder %s24, 1
      %p68 = por %p66, %p67
      %p70 = scmp.ne.s32.totalorder %s55, %s69
      %p71 = scmp.eq.s32.totalorder %s24, 0
      %p72 = por %p70, %p71
      %s74 = sadd.s32 %s73, 1
      %p77 = scmp.eq.s32.totalorder %s18, 1
      %p78 = scmp.ne.s32.totalorder %s73, %s75
      %p79 = scmp.eq.s32.totalorder %s18, 0
      %p80 = por %p78, %p79
      %p81 = scmp.ne.s32.totalorder %s73, %s75
      %p82 = scmp.eq.s32.totalorder %s23, 1
      %p83 = por %p81, %p82
      %p84 = scmp.ne.s32.totalorder %s75, %s76
      %p85 = scmp.eq.s32.totalorder %s23, 0
      %p86 = por %p84, %p85
      %p87 = scmp.ne.s32.totalorder %s75, %s76
      %p88 = scmp.eq.s32.totalorder %s24, 1
      %p89 = por %p87, %p88
      %p91 = scmp.ne.s32.totalorder %s76, %s90
      %p92 = scmp.eq.s32.totalorder %s24, 0
      %p93 = por %p91, %p92
      %s95 = sadd.s32 %s94, 1
      %p98 = scmp.eq.s32.totalorder %s18, 1
      %p99 = scmp.ne.s32.totalorder %s94, %s96
      %p100 = scmp.eq.s32.totalorder %s18, 0
      %p101 = por %p99, %p100
      %p102 = scmp.ne.s32.totalorder %s94, %s96
      %p103 = scmp.eq.s32.totalorder %s23, 1
      %p104 = por %p102, %p103
      %p105 = scmp.ne.s32.totalorder %s96, %s97
      %p106 = scmp.eq.s32.totalorder %s23, 0
      %p107 = por %p105, %p106
      %p108 = scmp.ne.s32.totalorder %s96, %s97
      %p109 = scmp.eq.s32.totalorder %s24, 1
      %p110 = por %p108, %p109
      %p112 = scmp.ne.s32.totalorder %s97, %s111
      %p113 = scmp.eq.s32.totalorder %s24, 0
      %p114 = por %p112, %p113
      %s115 = ssub.s32 %s18, %s25
      %p116 = scmp.eq.s32.totalorder %s115, 0
      %s118 = sadd.s32 %s117, 1
      %s119 = scalar_select %p116, %s117, %s118
      %p122 = pneg %p116
      %p123 = scmp.eq.s32.totalorder %s18, 1
      %p124 = por %p122, %p123
      %p125 = scmp.ne.s32.totalorder %s117, %s120
      %p126 = scmp.eq.s32.totalorder %s18, 0
      %p127 = por %p125, %p126
      %p128 = scmp.ne.s32.totalorder %s117, %s120
      %p129 = scmp.eq.s32.totalorder %s23, 1
      %p130 = por %p128, %p129
      %p131 = scmp.ne.s32.totalorder %s120, %s121
      %p132 = scmp.eq.s32.totalorder %s23, 0
      %p133 = por %p131, %p132
      %p134 = scmp.ne.s32.totalorder %s120, %s121
      %p135 = scmp.eq.s32.totalorder %s24, 1
      %p136 = por %p134, %p135
      %p138 = scmp.ne.s32.totalorder %s121, %s137
      %p139 = scmp.eq.s32.totalorder %s24, 0
      %p140 = por %p138, %p139
      %p141 = scmp.le.s32.totalorder 1, %s18
      %p142 = scmp.lt.s32.totalorder %s18, 3
      %p143 = pnand %p141, %p142
      %p144 = pneg %p143
      // Predicated region
      $region9: #{tpu_custom_call.1} parent=5 // pred_check
        _
      $region10: #{tpu_custom_call.1} parent=5 // pred_check_branch
        %146 = sbr.rel (%p143) target = $region12
      $region11: #{tpu_custom_call.1} parent=5 // pred_region
        %s147 = ssub.s32 %s18, 1
        // Predicated region
        $region13: #{tpu_custom_call.1} parent=11 // pred_check
          %p148 = pneg %p65
        $region14: #{tpu_custom_call.1} parent=11 // pred_check_branch
          %150 = sbr.rel (%p148) target = $region16
        $region15: #{tpu_custom_call.1} parent=11 // pred_region
          %s152 = ssub.s32 512, 512
          %153 = vsyncadd [#allocation6], %s152
          %s155 = sshll.u32 [#allocation5], 4
          %s156 = int_to_ptr.vmem [resolvable:$true] %s155
          %158 = dma.hbm_to_vmem [thread:$0]  %s1, 512, %s156, [#allocation6]
        $region16: #{tpu_custom_call.1} parent=11 // pred_fallthru
          _
        // Predicated region
        $region17: #{tpu_custom_call.1} parent=11 // pred_check
          %p159 = pneg %p86
        $region18: #{tpu_custom_call.1} parent=11 // pred_check_branch
          %161 = sbr.rel (%p159) target = $region20
        $region19: #{tpu_custom_call.1} parent=11 // pred_region
          %s163 = ssub.s32 512, 512
          %164 = vsyncadd [#allocation6], %s163
          %s166 = sshll.u32 [#allocation7], 4
          %s167 = int_to_ptr.vmem [resolvable:$true] %s166
          %169 = dma.hbm_to_vmem [thread:$0]  %s2, 512, %s167, [#allocation6]
        $region20: #{tpu_custom_call.1} parent=11 // pred_fallthru
          _
        // Predicated region
        $region21: #{tpu_custom_call.1} parent=11 // pred_check
          %p170 = pneg %p107
        $region22: #{tpu_custom_call.1} parent=11 // pred_check_branch
          %172 = sbr.rel (%p170) target = $region24
        $region23: #{tpu_custom_call.1} parent=11 // pred_region
          %s174 = ssub.s32 512, 512
          %175 = vsyncadd [#allocation9], %s174
          %s177 = sshll.u32 [#allocation8], 4
          %s178 = int_to_ptr.vmem [resolvable:$true] %s177
          %180 = dma.hbm_to_vmem [thread:$0]  %s3, 512, %s178, [#allocation9]
        $region24: #{tpu_custom_call.1} parent=11 // pred_fallthru
          _
      $region12: #{tpu_custom_call.1} parent=5 // pred_fallthru
        _
      %p181 = scmp.lt.s32.totalorder %s18, 2
      // Predicated region
      $region25: #{tpu_custom_call.1} parent=5 // pred_check
        %p182 = pneg %p181
      $region26: #{tpu_custom_call.1} parent=5 // pred_check_branch
        %184 = sbr.rel (%p182) target = $region28
      $region27: #{tpu_custom_call.1} parent=5 // pred_region
        // Predicated region
        $region29: #{tpu_custom_call.1} parent=27 // pred_check
          %p185 = pneg %p38
        $region30: #{tpu_custom_call.1} parent=27 // pred_check_branch
          %187 = sbr.rel (%p185) target = $region32
        $region31: #{tpu_custom_call.1} parent=27 // pred_region
          %s188 = sand.u32 %s28, 1
          %s189 = scalar_lea.sflag [#allocation3], %s188
          %s190 = sand.u32 %s28, 1
          %s191 = smul.addr %s190, 32
          %s192 = scalar_lea.vmem [#allocation2], %s191
          %s194 = ssub.s32 512, 512
          %195 = vsyncadd %s189, %s194
          %s196 = smul.addr %s18, 4
          %s197 = smul.addr %s196, 128
          %s198 = scalar_lea.hbm %s0, %s197
          %s200 = sshll.u32 %s192, 4
          %s201 = int_to_ptr.vmem [resolvable:$true] %s200
          %203 = dma.hbm_to_vmem [thread:$0]  %s198, 512, %s201, %s189
        $region32: #{tpu_custom_call.1} parent=27 // pred_fallthru
          _
      $region28: #{tpu_custom_call.1} parent=5 // pred_fallthru
        _
      %p204 = scmp.le.s32.totalorder 1, %s18
      %p205 = scmp.lt.s32.totalorder %s18, 3
      %p206 = pnand %p204, %p205
      %p207 = pneg %p206
      // Predicated region
      $region33: #{tpu_custom_call.1} parent=5 // pred_check
        _
      $region34: #{tpu_custom_call.1} parent=5 // pred_check_branch
        %209 = sbr.rel (%p206) target = $region36
      $region35: #{tpu_custom_call.1} parent=5 // pred_region
        %s210 = ssub.s32 %s18, 1
        %s211 = sand.u32 %s31, 1
        %s212 = scalar_lea.sflag [#allocation3], %s211
        %s213 = sand.u32 %s31, 1
        %s214 = smul.addr %s213, 32
        %s215 = scalar_lea.vmem [#allocation2], %s214
        // Predicated region
        $region37: #{tpu_custom_call.1} parent=35 // pred_check
          %p216 = pneg %p44
        $region38: #{tpu_custom_call.1} parent=35 // pred_check_branch
          %218 = sbr.rel (%p216) target = $region40
        $region39: #{tpu_custom_call.1} parent=35 // pred_region
          %219 = dma.done %s212, 512
        $region40: #{tpu_custom_call.1} parent=35 // pred_fallthru
          _
        // Predicated region
        $region41: #{tpu_custom_call.1} parent=35 // pred_check
          %p220 = pneg %p65
        $region42: #{tpu_custom_call.1} parent=35 // pred_check_branch
          %222 = sbr.rel (%p220) target = $region44
        $region43: #{tpu_custom_call.1} parent=35 // pred_region
          %223 = dma.done [#allocation6], 512
        $region44: #{tpu_custom_call.1} parent=35 // pred_fallthru
          _
        // Predicated region
        $region45: #{tpu_custom_call.1} parent=35 // pred_check
          %p224 = pneg %p86
        $region46: #{tpu_custom_call.1} parent=35 // pred_check_branch
          %226 = sbr.rel (%p224) target = $region48
        $region47: #{tpu_custom_call.1} parent=35 // pred_region
          %227 = dma.done [#allocation6], 512
        $region48: #{tpu_custom_call.1} parent=35 // pred_fallthru
          _
        // Predicated region
        $region49: #{tpu_custom_call.1} parent=35 // pred_check
          %p228 = pneg %p107
        $region50: #{tpu_custom_call.1} parent=35 // pred_check_branch
          %230 = sbr.rel (%p228) target = $region52
        $region51: #{tpu_custom_call.1} parent=35 // pred_region
          %231 = dma.done [#allocation9], 512
        $region52: #{tpu_custom_call.1} parent=35 // pred_fallthru
          _
        %s232 = sand.u32 %s31, 1
        %s233 = scalar_lea.sflag [#allocation3], %s232
        %s234 = sand.u32 %s31, 1
        %s235 = smul.addr %s234, 32
        %s236 = scalar_lea.vmem [#allocation2], %s235
        %p237 = pneg %p44
        %p238 = pneg %p41
        %p239 = pneg %p65
        %p240 = pneg %p62
        %p241 = pneg %p86
        %p242 = pneg %p83
        %p243 = pneg %p107
        %p244 = pneg %p104
        %p245 = pneg %p133
        %p246 = pneg %p130
        %s247 = sand.u32 %s120, 1
        %s248 = scalar_lea.sflag [#allocation4], %s247
        %s249 = sand.u32 %s120, 1
        %s250 = smul.addr %s249, 32
        %s251 = scalar_lea.vmem [#allocation10], %s250
        %v252 = vld [vmem:[%s215] sm:$0xff]
        %v253 = vld [vmem:[%s215 + $0x8] sm:$0xff]
        %v254 = vld [vmem:[%s215 + $0x10] sm:$0xff]
        %v255 = vld [vmem:[%s215 + $0x18] sm:$0xff]
        %v256 = vld [vmem:[#allocation5] sm:$0xff]
        %v257 = vld [vmem:[#allocation5 + $0x8] sm:$0xff]
        %v258 = vld [vmem:[#allocation5 + $0x10] sm:$0xff]
        %v259 = vld [vmem:[#allocation5 + $0x18] sm:$0xff]
        %v260 = vld [vmem:[#allocation7] sm:$0xff]
        %v261 = vld [vmem:[#allocation7 + $0x8] sm:$0xff]
        %v262 = vld [vmem:[#allocation7 + $0x10] sm:$0xff]
        %v263 = vld [vmem:[#allocation7 + $0x18] sm:$0xff]
        %v264 = vld [vmem:[#allocation8] sm:$0xff]
        %v265 = vld [vmem:[#allocation8 + $0x8] sm:$0xff]
        %v266 = vld [vmem:[#allocation8 + $0x10] sm:$0xff]
        %v267 = vld [vmem:[#allocation8 + $0x18] sm:$0xff]
        %v268 = vmul.f32 %v252, %v256
        %v269 = vmul.f32 %v253, %v257
        %v270 = vmul.f32 %v254, %v258
        %v271 = vmul.f32 %v255, %v259
        %v272 = vxor.u32 %v268, 2147483648
        %v273 = vxor.u32 %v269, 2147483648
        %v274 = vxor.u32 %v270, 2147483648
        %v275 = vxor.u32 %v271, 2147483648
        %v276 = vmul.f32 %v272, 1.442695
        %v277 = vpow.pop %v276
        %v278 = vmul.f32 %v273, 1.442695
        %v279 = vpow.pop %v278
        %v280 = vmul.f32 %v274, 1.442695
        %v281 = vpow.pop %v280
        %v282 = vmul.f32 %v275, 1.442695
        %v283 = vpow.pop %v282
        %v284 = vadd.f32 %v277, 1.0
        %v285 = vadd.f32 %v279, 1.0
        %v286 = vadd.f32 %v281, 1.0
        %v287 = vadd.f32 %v283, 1.0
        %v288 = vrcp.pop %v284
        %v289 = vmul.f32 1.0, %v288
        %v290 = vrcp.pop %v285
        %v291 = vmul.f32 1.0, %v290
        %v292 = vrcp.pop %v286
        %v293 = vmul.f32 1.0, %v292
        %v294 = vrcp.pop %v287
        %v295 = vmul.f32 1.0, %v294
        %v296 = vmul.f32 %v252, %v289
        %v297 = vmul.f32 %v253, %v291
        %v298 = vmul.f32 %v254, %v293
        %v299 = vmul.f32 %v255, %v295
        %v300 = vadd.f32 %v252, %v253
        %v301 = vadd.f32 %v300, %v254
        %v302 = vadd.f32 %v301, %v255
        %303 = vadd.xlane.f32.xlu0 %v302
        %v304 = vpop.xlane.xlu0 %303
        %v305 = vrcp.pop 512.0
        %v306 = vmul.f32 %v304, %v305
        %v307 = vsub.f32 %v252, %v306
        %v308 = vsub.f32 %v253, %v306
        %v309 = vsub.f32 %v254, %v306
        %v310 = vsub.f32 %v255, %v306
        %v311 = vmul.f32 %v307, %v307
        %v312 = vmul.f32 %v308, %v308
        %v313 = vmul.f32 %v309, %v309
        %v314 = vmul.f32 %v310, %v310
        %v315 = vadd.f32 %v311, %v312
        %v316 = vadd.f32 %v315, %v313
        %v317 = vadd.f32 %v316, %v314
        %318 = vadd.xlane.f32.xlu0 %v317
        %v319 = vpop.xlane.xlu0 %318
        %v320 = vmul.f32 %v319, %v305
        %v321 = vadd.f32 %v320, 1e-05
        %v322 = vrsqrt.pop %v321
        %v323 = vmul.f32 %v260, %v322
        %v324 = vmul.f32 %v261, %v322
        %v325 = vmul.f32 %v262, %v322
        %v326 = vmul.f32 %v263, %v322
        %v327 = vmul.f32 %v296, %v323
        %v328 = vmul.f32 %v297, %v324
        %v329 = vmul.f32 %v298, %v325
        %v330 = vmul.f32 %v299, %v326
        %v331 = vadd.f32 %v327, %v264
        %v332 = vadd.f32 %v328, %v265
        %v333 = vadd.f32 %v329, %v266
        %v334 = vadd.f32 %v330, %v267
        %335 = vst [vmem:[%s251] sm:$0xff] %v331
        %336 = vst [vmem:[%s251 + $0x8] sm:$0xff] %v332
        %337 = vst [vmem:[%s251 + $0x10] sm:$0xff] %v333
        %338 = vst [vmem:[%s251 + $0x18] sm:$0xff] %v334
        %s339 = sand.u32 %s120, 1
        %s340 = scalar_lea.sflag [#allocation4], %s339
        %s341 = sand.u32 %s120, 1
        %s342 = smul.addr %s341, 32
        %s343 = scalar_lea.vmem [#allocation10], %s342
        // Predicated region
        $region53: #{tpu_custom_call.1} parent=35 // pred_check
          %p344 = pneg %p130
        $region54: #{tpu_custom_call.1} parent=35 // pred_check_branch
          %346 = sbr.rel (%p344) target = $region56
        $region55: #{tpu_custom_call.1} parent=35 // pred_region
          %s348 = ssub.s32 512, 512
          %349 = vsyncadd %s340, %s348
          %s350 = smul.addr %s23, 4
          %s351 = smul.addr %s350, 128
          %s352 = scalar_lea.hbm %s4, %s351
          %s354 = sshll.u32 %s343, 4
          %s355 = int_to_ptr.vmem [resolvable:$true] %s354
          %357 = dma.vmem_to_hbm [thread:$0]  %s355, 512, %s352, %s340
        $region56: #{tpu_custom_call.1} parent=35 // pred_fallthru
          _
      $region36: #{tpu_custom_call.1} parent=5 // pred_fallthru
        _
      %p358 = scmp.le.s32.totalorder 2, %s18
      // Predicated region
      $region57: #{tpu_custom_call.1} parent=5 // pred_check
        %p359 = pneg %p358
      $region58: #{tpu_custom_call.1} parent=5 // pred_check_branch
        %361 = sbr.rel (%p359) target = $region60
      $region59: #{tpu_custom_call.1} parent=5 // pred_region
        %s362 = ssub.s32 %s18, 2
        // Predicated region
        $region61: #{tpu_custom_call.1} parent=59 // pred_check
          %p363 = pneg %p136
        $region62: #{tpu_custom_call.1} parent=59 // pred_check_branch
          %365 = sbr.rel (%p363) target = $region64
        $region63: #{tpu_custom_call.1} parent=59 // pred_region
          %s366 = sand.u32 %s121, 1
          %s367 = scalar_lea.sflag [#allocation4], %s366
          %s368 = sand.u32 %s121, 1
          %s369 = smul.addr %s368, 32
          %s370 = scalar_lea.vmem [#allocation10], %s369
          %371 = dma.done %s367, 512
        $region64: #{tpu_custom_call.1} parent=59 // pred_fallthru
          _
      $region60: #{tpu_custom_call.1} parent=5 // pred_fallthru
        _
    $region6: #{tpu_custom_call.1} parent=1 // loop_footer
      %s22 = sadd.s32 1, %s18
    $region7: #{tpu_custom_call.1} parent=1 // loop_footer_branch
      %17 = sbr.rel target = $region3
    $region8: #{tpu_custom_call.1} parent=1 // loop_exit
      _
    %372 = vsyncpa [#allocation3], 1
    %s373 = scalar_lea.sflag [#allocation3], 1
    %374 = vsyncpa %s373, 1
    %375 = vsyncpa [#allocation6], 1
    %376 = vsyncpa [#allocation9], 1
    %377 = vsyncpa [#allocation4], 1
    %s378 = scalar_lea.sflag [#allocation4], 1
    %379 = vsyncpa %s378, 1

</llo_original>
